<compile_context>
chip_gen: v7x
topology: tpu7x:2x2x1
jax: 0.10.0
libtpu: 0.0.40
codegen_flags: <defaults>
</compile_context>

<pallas_src>
import numpy as np
import jax
import jax.numpy as jnp
from jax import lax
from jax.experimental import pallas as pl
from jax.experimental.pallas import tpu as pltpu

EPS = 1e-5


# ----------------------------- Pallas kernel ------------------------------- #

def _make_kernel(apply_relu, mode):
    """out = maybe_relu( taps @ w + bias [+ shortcut] ).

    mode: "none"                 -> no shortcut
          "add"                  -> add precomputed residual rows
          "proj"                 -> fused 1x1 projection: xs @ ws + sb
    BN scale is pre-folded into w (and ws); bias = beta - mean*scale.
    """
    def kernel(*refs):
        if mode == "proj":
            taps_ref, w_ref, b_ref, xs_ref, ws_ref, sb_ref, out_ref = refs
        elif mode == "add":
            taps_ref, w_ref, b_ref, res_ref, out_ref = refs
        else:
            taps_ref, w_ref, b_ref, out_ref = refs

        # Single MXU matmul, K = 9*Cin, f32 accumulation.
        y = jnp.dot(taps_ref[...], w_ref[...],
                    preferred_element_type=jnp.float32)
        y = y + b_ref[...]                           # folded-BN bias (f32)

        if mode == "proj":
            y = y + jnp.dot(xs_ref[...], ws_ref[...],
                            preferred_element_type=jnp.float32)
            y = y + sb_ref[...]
        elif mode == "add":
            y = y + res_ref[...].astype(jnp.float32)

        if apply_relu:
            y = jnp.maximum(y, 0.0)
        out_ref[...] = y.astype(out_ref.dtype)
    return kernel


# --------------------------- tiling heuristics ------------------------------ #

def _choose_cout_tile(cout):
    # Keep the matmul N dimension at <=256 (matches v6e/v7x MXU, bounds the
    # per-step accumulator) via a 2-D grid when Cout is large.
    for t in (256, 128):
        if cout > t and cout % t == 0:
            return t
    return cout


def _choose_tile_p(P, stream_row_bytes, resident_bytes,
                   max_tile=512, budget=24 * 1024 * 1024, target_steps=8):
    """Largest row tile whose double-buffered working set fits `budget`
    (sized for v7x's 64 MiB physical / ~32 MiB scoped VMEM), then shrink until
    the grid has enough steps to shard across TensorCores."""
    tile = max_tile
    while tile > 8 and (2 * tile * stream_row_bytes + 2 * resident_bytes) > budget:
        tile //= 2
    while tile > 8 and pl.cdiv(P, tile) < target_steps:
        tile //= 2
    return tile


# ------------------------------ kernel wrapper ------------------------------ #

def fused_conv_block(taps, w, bias, *, relu=True, residual=None, proj=None,
                     out_dtype=jnp.float32, max_tile=512):
    """taps: (P, K) activations (K = 9*Cin, bf16), w: (K, Cout) BN-folded
    weights (bf16), bias: (Cout,) f32.
    residual: (P, Cout) rows added before the ReLU (identity shortcut), or None.
    proj: (xs, ws, sb) fused 1x1 projection shortcut, or None.
    Returns (P, Cout) in out_dtype."""
    P, K = taps.shape
    Kw, Cout = w.shape
    assert K == Kw
    assert residual is None or proj is None

    cout_t = _choose_cout_tile(Cout)
    n_ct = Cout // cout_t

    # VMEM-budget estimate (bytes per streamed row / resident operands).
    stream = taps.dtype.itemsize * K + np.dtype(out_dtype).itemsize * cout_t
    resident = w.size * w.dtype.itemsize + 4 * Cout
    if residual is not None:
        stream += residual.dtype.itemsize * cout_t
    if proj is not None:
        xs, ws, sb = proj
        stream += xs.dtype.itemsize * xs.shape[1]
        resident += ws.size * ws.dtype.itemsize + 4 * Cout
    tile_p = _choose_tile_p(P, stream, resident, max_tile=max_tile)

    n_rt = pl.cdiv(P, tile_p)
    P_pad = n_rt * tile_p

    def pad_rows(a):
        if a.shape[0] == P_pad:
            return a
        return jnp.pad(a, ((0, P_pad - a.shape[0]), (0, 0)))

    in_specs = [
        pl.BlockSpec((tile_p, K), lambda i, j: (i, 0)),       # taps (row tile)
        pl.BlockSpec((K, cout_t), lambda i, j: (0, j)),       # folded weights
        pl.BlockSpec((1, cout_t), lambda i, j: (0, j)),       # folded-BN bias
    ]
    args = [pad_rows(taps), w, bias.reshape(1, Cout).astype(jnp.float32)]

    mode = "none"
    if residual is not None:
        mode = "add"
        in_specs.append(pl.BlockSpec((tile_p, cout_t), lambda i, j: (i, j)))
        args.append(pad_rows(residual))
    elif proj is not None:
        mode = "proj"
        xs, ws, sb = proj
        cin_s = xs.shape[1]
        in_specs += [
            pl.BlockSpec((tile_p, cin_s), lambda i, j: (i, 0)),
            pl.BlockSpec((cin_s, cout_t), lambda i, j: (0, j)),
            pl.BlockSpec((1, cout_t), lambda i, j: (0, j)),
        ]
        args += [pad_rows(xs), ws, sb.reshape(1, Cout).astype(jnp.float32)]

    out = pl.pallas_call(
        _make_kernel(relu, mode),
        out_shape=jax.ShapeDtypeStruct((P_pad, Cout), out_dtype),
        grid=(n_rt, n_ct),
        in_specs=in_specs,
        # Note: out last dim = Cout (lane-dense only when Cout is a multiple of
        # 128); padding small Cout to 128 lanes would inflate HBM writes more
        # than the masked-store cost here since reads dominate by ~9x.
        out_specs=pl.BlockSpec((tile_p, cout_t), lambda i, j: (i, j)),
        compiler_params=pltpu.CompilerParams(
            dimension_semantics=("parallel", "parallel"),
            vmem_limit_bytes=48 * 1024 * 1024),
    )(*args)
    return out[:P]


# ------------------------------- JAX glue ----------------------------------- #

def _im2col_3x3(x_nhwc, stride):
    """3x3, padding=1, given stride. Returns (N*Hout*Wout, 9*C), (Hout, Wout).
    Tap order (ky, kx, c) matches w.reshape(9*Cin, Cout) of HWIO weights."""
    N, H, W, C = x_nhwc.shape
    xp = jnp.pad(x_nhwc, ((0, 0), (1, 1), (1, 1), (0, 0)))
    Hout = (H - 1) // stride + 1
    Wout = (W - 1) // stride + 1
    cols = []
    for ky in range(3):
        for kx in range(3):
            slab = xp[:, ky:ky + (Hout - 1) * stride + 1:stride,
                         kx:kx + (Wout - 1) * stride + 1:stride, :]
            cols.append(slab.reshape(N * Hout * Wout, C))
    return jnp.concatenate(cols, axis=-1), (Hout, Wout)


def _fold_bn(gamma, beta, mean, var):
    scale = gamma / jnp.sqrt(var + EPS)
    bias = beta - mean * scale
    return scale, bias


def init_basic_block_params(key, in_channels, out_channels, stride):
    ks = jax.random.split(key, 12)

    def bn_params(kg, kb, km, kv, c):
        gamma = jax.random.uniform(kg, (c,), jnp.float32, 0.5, 1.5)
        beta = 0.1 * jax.random.normal(kb, (c,), jnp.float32)
        mean = 0.1 * jax.random.normal(km, (c,), jnp.float32)
        var = jax.random.uniform(kv, (c,), jnp.float32, 0.5, 1.5)
        return gamma, beta, mean, var

    p = {
        "w1": 0.2 * jax.random.normal(ks[0], (3, 3, in_channels, out_channels),
                                      jnp.float32),               # HWIO
        "bn1": bn_params(ks[1], ks[2], ks[3], ks[4], out_channels),
        "w2": 0.2 * jax.random.normal(ks[5], (3, 3, out_channels, out_channels),
                                      jnp.float32),
        "bn2": bn_params(ks[6], ks[7], ks[8], ks[9], out_channels),
        "has_proj": (stride != 1) or (in_channels != out_channels),
    }
    if p["has_proj"]:
        p["ws"] = 0.2 * jax.random.normal(
            ks[10], (1, 1, in_channels, out_channels), jnp.float32)
        p["bns"] = bn_params(*jax.random.split(ks[11], 4), out_channels)
    return p


def basic_block_forward(x_nchw, params, stride):
    x = jnp.transpose(x_nchw, (0, 2, 3, 1)).astype(jnp.float32)   # NCHW -> NHWC
    N, H, W, Cin = x.shape
    Cout = params["w1"].shape[-1]

    s1, b1 = _fold_bn(*params["bn1"])
    s2, b2 = _fold_bn(*params["bn2"])
    # Fold BN scale into the conv weights; bf16 for the MXU / HBM streams.
    w1 = (params["w1"] * s1).reshape(9 * Cin, Cout).astype(jnp.bfloat16)
    w2 = (params["w2"] * s2).reshape(9 * Cout, Cout).astype(jnp.bfloat16)

    # conv1 -> bn1 -> relu  (bf16 intermediate halves HBM for h1 and taps2)
    taps1, (Hout, Wout) = _im2col_3x3(x, stride)
    h1 = fused_conv_block(taps1.astype(jnp.bfloat16), w1, b1,
                          relu=True, out_dtype=jnp.bfloat16)
    h1 = h1.reshape(N, Hout, Wout, Cout)

    # conv2 -> bn2 -> (+ shortcut) -> relu, fully fused in one kernel.
    taps2, _ = _im2col_3x3(h1, 1)                                  # bf16
    if params["has_proj"]:
        ss, bs = _fold_bn(*params["bns"])
        ws = (params["ws"] * ss).reshape(Cin, Cout).astype(jnp.bfloat16)
        xs = x[:, ::stride, ::stride, :].reshape(N * Hout * Wout, Cin)
        out = fused_conv_block(taps2, w2, b2, relu=True,
                               proj=(xs.astype(jnp.bfloat16), ws, bs),
                               out_dtype=jnp.float32)
    else:
        res = x.reshape(N * H * W, Cin)          # Cin == Cout, stride == 1
        out = fused_conv_block(taps2, w2, b2, relu=True, residual=res,
                               out_dtype=jnp.float32)
    out = out.reshape(N, Hout, Wout, Cout)
    return jnp.transpose(out, (0, 3, 1, 2))                        # NHWC -> NCHW


# --------------------------- pure-JAX reference ----------------------------- #

def basic_block_reference(x_nchw, params, stride):
    x = jnp.transpose(x_nchw, (0, 2, 3, 1)).astype(jnp.float32)
    dn = ("NHWC", "HWIO", "NHWC")

    def conv(inp, w, s, pad):
        return lax.conv_general_dilated(inp, w, (s, s), pad,
                                        dimension_numbers=dn,
                                        precision=lax.Precision.HIGHEST)

    def bn(inp, p):
        gamma, beta, mean, var = p
        return (inp - mean) * gamma / jnp.sqrt(var + EPS) + beta

    h = jax.nn.relu(bn(conv(x, params["w1"], stride, ((1, 1), (1, 1))),
                       params["bn1"]))
    h = bn(conv(h, params["w2"], 1, ((1, 1), (1, 1))), params["bn2"])
    if params["has_proj"]:
        sc = bn(conv(x, params["ws"], stride, ((0, 0), (0, 0))), params["bns"])
    else:
        sc = x
    out = jax.nn.relu(h + sc)
    return jnp.transpose(out, (0, 3, 1, 2))


# ----------------------------------- main ----------------------------------- #

if __name__ == "__main__":
    key = jax.random.PRNGKey(0)
    configs = [
        # (N, Cin, Cout, H,  W,  stride)
        (2, 4, 8, 16, 16, 1),   # projection shortcut (channel change)
        (2, 8, 8, 16, 16, 1),   # identity shortcut
        (2, 4, 8, 16, 16, 2),   # strided projection shortcut
    ]
    for idx, (N, Cin, Cout, H, W, stride) in enumerate(configs):
        kx, kp = jax.random.split(jax.random.fold_in(key, idx))
        x = jax.random.normal(kx, (N, Cin, H, W), jnp.float32)  # NCHW
        params = init_basic_block_params(kp, Cin, Cout, stride)

        out = jax.block_until_ready(basic_block_forward(x, params, stride))
        ref = basic_block_reference(x, params, stride)

        Hout = (H - 1) // stride + 1
        Wout = (W - 1) // stride + 1
        if out.shape != (N, Cout, Hout, Wout):
            raise AssertionError(f"config {idx}: bad shape {out.shape}")
        err = float(jnp.max(jnp.abs(out - ref)))
        denom = float(jnp.max(jnp.abs(ref))) + 1e-6
        if err / denom > 3e-2:   # bf16 activations/weights, f32 accumulation
            raise AssertionError(
                f"config {idx}: max abs err {err} (rel {err / denom})")
    print("KERNEL_OK")
</pallas_src>

<mosaic_0001>
module attributes {stable_mosaic.version = 11 : i64} {
  func.func @kernel(%arg0: i32, %arg1: i32, %arg2: memref<64x36xbf16, #tpu.memory_space<vmem>>, %arg3: memref<36x8xbf16, #tpu.memory_space<vmem>>, %arg4: memref<1x8xf32, #tpu.memory_space<vmem>>, %arg5: memref<64x8xbf16, #tpu.memory_space<vmem>>) attributes {dimension_semantics = [#tpu.dimension_semantics<parallel>, #tpu.dimension_semantics<parallel>], iteration_bounds = array<i64: 8, 1>, scalar_prefetch = 0 : i64, scratch_operands = 0 : i64, tpu.core_type = #tpu.core_type<tc>, window_params = [{transform_indices = @transform_0, window_bounds = array<i64: 64, 36>}, {transform_indices = @transform_1, window_bounds = array<i64: 36, 8>}, {transform_indices = @transform_2, window_bounds = array<i64: 1, 8>}, {transform_indices = @transform_3, window_bounds = array<i64: 64, 8>}]} {
    %c0 = arith.constant 0 : index
    %c0_0 = arith.constant 0 : index
    %0 = vector.load %arg2[%c0, %c0_0] : memref<64x36xbf16, #tpu.memory_space<vmem>>, vector<64x36xbf16>
    %c0_1 = arith.constant 0 : index
    %c0_2 = arith.constant 0 : index
    %1 = vector.load %arg3[%c0_1, %c0_2] : memref<36x8xbf16, #tpu.memory_space<vmem>>, vector<36x8xbf16>
    %cst = arith.constant dense<0.000000e+00> : vector<64x8xf32>
    %2 = tpu.matmul %0, %1, %cst {dimension_numbers = #tpu.dot_dimension_numbers<[1], [0], [0], [1], [0, 0, 1, 1], [], []>} : vector<64x36xbf16>, vector<36x8xbf16>, vector<64x8xf32> -> vector<64x8xf32>
    %c0_3 = arith.constant 0 : index
    %c0_4 = arith.constant 0 : index
    %3 = vector.load %arg4[%c0_3, %c0_4] : memref<1x8xf32, #tpu.memory_space<vmem>>, vector<1x8xf32>
    %4 = vector.broadcast %3 : vector<1x8xf32> to vector<64x8xf32>
    %5 = arith.addf %2, %4 : vector<64x8xf32>
    %cst_5 = arith.constant 0.000000e+00 : f32
    %6 = vector.broadcast %cst_5 : f32 to vector<64x8xf32>
    %7 = arith.maximumf %5, %6 : vector<64x8xf32>
    %8 = arith.truncf %7 : vector<64x8xf32> to vector<64x8xbf16>
    %c0_6 = arith.constant 0 : index
    %c0_7 = arith.constant 0 : index
    %9 = vector.load %arg5[%c0_6, %c0_7] : memref<64x8xbf16, #tpu.memory_space<vmem>>, vector<64x8xbf16>
    tpu.vector_store %arg5[%c0_6, %c0_7], %8 {strides = array<i32>} : memref<64x8xbf16, #tpu.memory_space<vmem>>, vector<64x8xbf16>,
    return
  }
  func.func @transform_0(%arg0: i32, %arg1: i32) -> (i32, i32) {
    %c0_i32 = arith.constant 0 : i32
    %c0_i32_0 = arith.constant 0 : i32
    return %arg0, %c0_i32 : i32, i32
  }
  func.func @transform_1(%arg0: i32, %arg1: i32) -> (i32, i32) {
    %c0_i32 = arith.constant 0 : i32
    %c0_i32_0 = arith.constant 0 : i32
    return %c0_i32, %arg1 : i32, i32
  }
  func.func @transform_2(%arg0: i32, %arg1: i32) -> (i32, i32) {
    %c0_i32 = arith.constant 0 : i32
    %c0_i32_0 = arith.constant 0 : i32
    return %c0_i32, %arg1 : i32, i32
  }
  func.func @transform_3(%arg0: i32, %arg1: i32) -> (i32, i32) {
    %c0_i32 = arith.constant 0 : i32
    return %arg0, %arg1 : i32, i32
  }
}

</mosaic_0001>

<llo_original>
// kernel: tpu_custom_call.1
$region0: #{tpu_custom_call.1}
  #allocation0 [shape = 'u32[]', space=smem, size = 0x4, offset = 0x4, fixed_abs, tag = 'smem constant byte address 0x4 - core index']
  #allocation1 [shape = 'u32[144,128]{1,0:T(1,128)}', space=vmem, size = 0x12000, scoped, tag = 'internal scratch']
  %s0 = inlined_call_operand.vmem [shape: bf16[512,36], index: 0, kind: input, shape index: {}]
  %s1 = inlined_call_operand.vmem [shape: bf16[36,8], index: 1, kind: input, shape index: {}]
  %s2 = inlined_call_operand.vmem [shape: f32[1,8], index: 2, kind: input, shape index: {}]
  %s3 = inlined_call_operand.vmem [shape: bf16[512,8], index: 3, kind: output, shape index: {}]
  %s4 = sld [smem:[#allocation0]]
  $region45: #{tpu_custom_call.1} parent=0
    _
  %s6 = ssub.s32 1, %s4
  %s7 = scalar_select 0, %s6, %s4
  loop: start=0, step=1, limit=10
  $region2: #{tpu_custom_call.1} parent=0 // loop_pre_header
    _
  $region3: #{tpu_custom_call.1} parent=0 // loop_header
    %s9 = sphi 0, %s13
    %p10 = scmp.ge.s32.totalorder %s9, 10
    %s16 = sphi 0, %s28
    %s17 = sphi 0, %s24
    %s18 = sphi 0, %s16
    %s19 = sphi 0, %s17
    %s20 = sphi 0, %s18
    %s21 = sphi 0, %s19
    %s31 = sphi 0, %s33
    %s34 = sphi 0, %s31
    %s35 = sphi 0, %s34
    %s51 = sphi 0, %s35
    %s57 = sphi 0, %s59
    %s60 = sphi 0, %s57
    %s61 = sphi 0, %s60
    %s77 = sphi 0, %s61
    %s83 = sphi 0, %s85
    %s86 = sphi 0, %s83
    %s87 = sphi 0, %s86
    %s103 = sphi 0, %s87
    %s111 = sphi 0, %s113
    %s114 = sphi 0, %s111
    %s115 = sphi 0, %s114
    %s131 = sphi 0, %s115
  $region4: #{tpu_custom_call.1} parent=0 // loop_header_branch
    %12 = sbr.rel (%p10) target = $region8
  $region5: #{tpu_custom_call.1} parent=0 // loop_body
    %s14 = ssub.s32 %s9, 1
    %s15 = ssub.s32 %s9, 2
    %s22 = sadd.s32 1, %s17
    %p23 = scmp.ge.s32.totalorder %s22, 1
    %s24 = scalar_select %p23, 0, %s22
    %s25 = sadd.s32 1, %s16
    %s26 = scalar_select %p23, %s25, %s16
    %p27 = scmp.ge.s32.totalorder %s26, 8
    %s28 = scalar_select %p27, 0, %s26
    %s29 = ssub.s32 %s16, %s28
    %p30 = scmp.eq.s32.totalorder %s29, 0
    %s32 = sadd.s32 %s31, 1
    %s33 = scalar_select %p30, %s31, %s32
    %p36 = pneg %p30
    %p37 = scmp.eq.s32.totalorder %s9, 7
    %p38 = por %p36, %p37
    %p39 = scmp.ne.s32.totalorder %s31, %s34
    %p40 = scmp.eq.s32.totalorder %s9, 0
    %p41 = por %p39, %p40
    %p42 = scmp.ne.s32.totalorder %s31, %s34
    %p43 = scmp.eq.s32.totalorder %s14, 7
    %p44 = por %p42, %p43
    %p45 = scmp.ne.s32.totalorder %s34, %s35
    %p46 = scmp.eq.s32.totalorder %s14, 0
    %p47 = por %p45, %p46
    %p48 = scmp.ne.s32.totalorder %s34, %s35
    %p49 = scmp.eq.s32.totalorder %s15, 7
    %p50 = por %p48, %p49
    %p52 = scmp.ne.s32.totalorder %s35, %s51
    %p53 = scmp.eq.s32.totalorder %s15, 0
    %p54 = por %p52, %p53
    %s55 = ssub.s32 %s17, %s24
    %p56 = scmp.eq.s32.totalorder %s55, 0
    %s58 = sadd.s32 %s57, 1
    %s59 = scalar_select %p56, %s57, %s58
    %p62 = pneg %p56
    %p63 = scmp.eq.s32.totalorder %s9, 7
    %p64 = por %p62, %p63
    %p65 = scmp.ne.s32.totalorder %s57, %s60
    %p66 = scmp.eq.s32.totalorder %s9, 0
    %p67 = por %p65, %p66
    %p68 = scmp.ne.s32.totalorder %s57, %s60
    %p69 = scmp.eq.s32.totalorder %s14, 7
    %p70 = por %p68, %p69
    %p71 = scmp.ne.s32.totalorder %s60, %s61
    %p72 = scmp.eq.s32.totalorder %s14, 0
    %p73 = por %p71, %p72
    %p74 = scmp.ne.s32.totalorder %s60, %s61
    %p75 = scmp.eq.s32.totalorder %s15, 7
    %p76 = por %p74, %p75
    %p78 = scmp.ne.s32.totalorder %s61, %s77
    %p79 = scmp.eq.s32.totalorder %s15, 0
    %p80 = por %p78, %p79
    %s81 = ssub.s32 %s17, %s24
    %p82 = scmp.eq.s32.totalorder %s81, 0
    %s84 = sadd.s32 %s83, 1
    %s85 = scalar_select %p82, %s83, %s84
    %p88 = pneg %p82
    %p89 = scmp.eq.s32.totalorder %s9, 7
    %p90 = por %p88, %p89
    %p91 = scmp.ne.s32.totalorder %s83, %s86
    %p92 = scmp.eq.s32.totalorder %s9, 0
    %p93 = por %p91, %p92
    %p94 = scmp.ne.s32.totalorder %s83, %s86
    %p95 = scmp.eq.s32.totalorder %s14, 7
    %p96 = por %p94, %p95
    %p97 = scmp.ne.s32.totalorder %s86, %s87
    %p98 = scmp.eq.s32.totalorder %s14, 0
    %p99 = por %p97, %p98
    %p100 = scmp.ne.s32.totalorder %s86, %s87
    %p101 = scmp.eq.s32.totalorder %s15, 7
    %p102 = por %p100, %p101
    %p104 = scmp.ne.s32.totalorder %s87, %s103
    %p105 = scmp.eq.s32.totalorder %s15, 0
    %p106 = por %p104, %p105
    %s107 = ssub.s32 %s16, %s28
    %s108 = ssub.s32 %s17, %s24
    %s109 = sor.u32 %s107, %s108
    %p110 = scmp.eq.s32.totalorder %s109, 0
    %s112 = sadd.s32 %s111, 1
    %s113 = scalar_select %p110, %s111, %s112
    %p116 = pneg %p110
    %p117 = scmp.eq.s32.totalorder %s9, 7
    %p118 = por %p116, %p117
    %p119 = scmp.ne.s32.totalorder %s111, %s114
    %p120 = scmp.eq.s32.totalorder %s9, 0
    %p121 = por %p119, %p120
    %p122 = scmp.ne.s32.totalorder %s111, %s114
    %p123 = scmp.eq.s32.totalorder %s14, 7
    %p124 = por %p122, %p123
    %p125 = scmp.ne.s32.totalorder %s114, %s115
    %p126 = scmp.eq.s32.totalorder %s14, 0
    %p127 = por %p125, %p126
    %p128 = scmp.ne.s32.totalorder %s114, %s115
    %p129 = scmp.eq.s32.totalorder %s15, 7
    %p130 = por %p128, %p129
    %p132 = scmp.ne.s32.totalorder %s115, %s131
    %p133 = scmp.eq.s32.totalorder %s15, 0
    %p134 = por %p132, %p133
    %p135 = scmp.le.s32.totalorder 1, %s9
    %p136 = scmp.lt.s32.totalorder %s9, 9
    %p137 = pnand %p135, %p136
    %p138 = pneg %p137
    // Predicated region
    $region9: #{tpu_custom_call.1} parent=5 // pred_check
      _
    $region10: #{tpu_custom_call.1} parent=5 // pred_check_branch
      %140 = sbr.rel (%p137) target = $region12
    $region11: #{tpu_custom_call.1} parent=5 // pred_region
      %s141 = ssub.s32 %s9, 1
      // Predicated region
      $region13: #{tpu_custom_call.1} parent=11 // pred_check
        %p142 = pneg %p73
      $region14: #{tpu_custom_call.1} parent=11 // pred_check_branch
        %144 = sbr.rel (%p142) target = $region16
      $region15: #{tpu_custom_call.1} parent=11 // pred_region
        %p145 = scmp.lt.s32.totalorder %s19, 0
        %s146 = scalar_select %p145, %s19, 0
        %s147 = smul.addr %s146, 4
        %s148 = scalar_lea.vmem %s1, %s147
      $region16: #{tpu_custom_call.1} parent=11 // pred_fallthru
        _
      // Predicated region
      $region17: #{tpu_custom_call.1} parent=11 // pred_check
        %p149 = pneg %p99
      $region18: #{tpu_custom_call.1} parent=11 // pred_check_branch
        %151 = sbr.rel (%p149) target = $region20
      $region19: #{tpu_custom_call.1} parent=11 // pred_region
        %p152 = scmp.lt.s32.totalorder %s19, 0
        %s153 = scalar_select %p152, %s19, 0
        %s154 = scalar_lea.vmem %s2, %s153
      $region20: #{tpu_custom_call.1} parent=11 // pred_fallthru
        _
    $region12: #{tpu_custom_call.1} parent=5 // pred_fallthru
      _
    %p155 = scmp.lt.s32.totalorder %s9, 8
    // Predicated region
    $region21: #{tpu_custom_call.1} parent=5 // pred_check
      %p156 = pneg %p155
    $region22: #{tpu_custom_call.1} parent=5 // pred_check_branch
      %158 = sbr.rel (%p156) target = $region24
    $region23: #{tpu_custom_call.1} parent=5 // pred_region
      // Predicated region
      $region25: #{tpu_custom_call.1} parent=23 // pred_check
        %p159 = pneg %p41
      $region26: #{tpu_custom_call.1} parent=23 // pred_check_branch
        %161 = sbr.rel (%p159) target = $region28
      $region27: #{tpu_custom_call.1} parent=23 // pred_region
        %s162 = smul.u32 8, %s16
        %p163 = scmp.lt.s32.totalorder %s162, 63
        %s164 = scalar_select %p163, %s162, 63
        %s165 = smul.addr %s164, 4
        %s166 = scalar_lea.vmem %s0, %s165
        %s167 = smul.u32 8, %s16
      $region28: #{tpu_custom_call.1} parent=23 // pred_fallthru
        _
    $region24: #{tpu_custom_call.1} parent=5 // pred_fallthru
      _
    %p168 = scmp.le.s32.totalorder 1, %s9
    %p169 = scmp.lt.s32.totalorder %s9, 9
    %p170 = pnand %p168, %p169
    %p171 = pneg %p170
    // Predicated region
    $region29: #{tpu_custom_call.1} parent=5 // pred_check
      _
    $region30: #{tpu_custom_call.1} parent=5 // pred_check_branch
      %173 = sbr.rel (%p170) target = $region32
    $region31: #{tpu_custom_call.1} parent=5 // pred_region
      %s174 = ssub.s32 %s9, 1
      %s175 = smul.u32 8, %s18
      %p176 = scmp.lt.s32.totalorder %s175, 63
      %s177 = scalar_select %p176, %s175, 63
      %s178 = smul.addr %s177, 4
      %s179 = scalar_lea.vmem %s0, %s178
      %p180 = pneg %p47
      %p181 = pneg %p44
      %p182 = scmp.lt.s32.totalorder %s19, 0
      %s183 = scalar_select %p182, %s19, 0
      %s184 = smul.addr %s183, 4
      %s185 = scalar_lea.vmem %s1, %s184
      %p186 = pneg %p73
      %p187 = pneg %p70
      %p188 = scmp.lt.s32.totalorder %s19, 0
      %s189 = scalar_select %p188, %s19, 0
      %s190 = scalar_lea.vmem %s2, %s189
      %p191 = pneg %p99
      %p192 = pneg %p96
      %p193 = pneg %p127
      %p194 = pneg %p124
      %s195 = smul.u32 8, %s18
      %p196 = scmp.lt.s32.totalorder %s195, 63
      %s197 = scalar_select %p196, %s195, 63
      %p198 = scmp.lt.s32.totalorder %s19, 0
      %s199 = scalar_select %p198, %s19, 0
      %s200 = sadd.s32 %s199, %s197
      %s201 = smul.addr %s200, 4
      %s202 = scalar_lea.vmem %s3, %s201
      %s203 = smul.u32 8, %s18
      %p204 = scmp.lt.s32.totalorder %s203, 63
      %s205 = scalar_select %p204, %s203, 63
      %s206 = smul.addr %s205, 4
      %s207 = scalar_lea.vmem %s0, %s206
      %s208 = smul.u32 8, %s18
      %p209 = scmp.lt.s32.totalorder %s19, 0
      %s210 = scalar_select %p209, %s19, 0
      %s211 = smul.addr %s210, 4
      %s212 = scalar_lea.vmem %s1, %s211
      %p213 = scmp.lt.s32.totalorder %s19, 0
      %s214 = scalar_select %p213, %s19, 0
      %s215 = scalar_lea.vmem %s2, %s214
      %s216 = smul.u32 8, %s18
      %p217 = scmp.lt.s32.totalorder %s216, 63
      %s218 = scalar_select %p217, %s216, 63
      %p219 = scmp.lt.s32.totalorder %s19, 0
      %s220 = scalar_select %p219, %s19, 0
      %s221 = sadd.s32 %s220, %s218
      %s222 = smul.addr %s221, 4
      %s223 = scalar_lea.vmem %s3, %s222
      %s224 = smul.u32 8, %s18
      %v226 = vld [vmem:[%s207] sm:$0xf]
      %v227 = vld [vmem:[%s207 + $0x4] sm:$0xf]
      %v228 = vld [vmem:[%s207 + $0x8] sm:$0xf]
      %v229 = vld [vmem:[%s207 + $0xc] sm:$0xf]
      %v230 = vld [vmem:[%s207 + $0x10] sm:$0xf]
      %v231 = vld [vmem:[%s207 + $0x14] sm:$0xf]
      %v232 = vld [vmem:[%s207 + $0x18] sm:$0xf]
      %v233 = vld [vmem:[%s207 + $0x1c] sm:$0xf]
      %v234 = vld [vmem:[%s212] sm:$0xf]
      %v235 = vld [vmem:[%s212 + $0x4] sm:$0xf]
      %v236 = vld [vmem:[%s212 + $0x8] sm:$0xf]
      %v237 = vld [vmem:[%s212 + $0xc] sm:$0xf]
      %v238 = vld [vmem:[%s212 + $0x10] sm:$0x3]
      %v239 = vld [vmem:[%s215] sm:$0x1]
      %v241 = vlaneseq
      %v242 = vshrl.u32 %v241, 7
      %v243 = vsub.s32 0, %v242
      %v244 = vrot.slane %v239, %v243
      %v254 = vunpack.c.l.b16 %v226
      %v255 = vunpack.c.l.b16 %v227
      %v256 = vunpack.c.l.b16 %v228
      %v257 = vunpack.c.l.b16 %v229
      %v258 = vunpack.c.l.b16 %v230
      %v259 = vunpack.c.l.b16 %v231
      %v260 = vunpack.c.l.b16 %v232
      %v261 = vunpack.c.l.b16 %v233
      %v262 = vpack.c.b16 %v255, %v254
      %v263 = vpack.c.b16 %v257, %v256
      %v264 = vpack.c.b16 %v259, %v258
      %v265 = vpack.c.b16 %v261, %v260
      %v271 = vunpack.c.l.b16 %v234
      %v272 = vunpack.c.l.b16 %v235
      %v273 = vunpack.c.l.b16 %v236
      %v274 = vunpack.c.l.b16 %v237
      %v275 = vunpack.c.l.b16 %v238
      %v276 = vpack.c.b16 %v272, %v271
      %v277 = vpack.c.b16 %v274, %v273
      %v278 = vpack.c.b16 %v275, %v275
      %vm281 = vcmask 293888
      %v283 = vsel %vm281, %v262, 0
      %v286 = vsel %vm281, %v263, 0
      %v289 = vsel %vm281, %v264, 0
      %v292 = vsel %vm281, %v265, 0
      %vm294 = vcmask 1041408
      %v296 = vsel %vm294, %v278, 0
      %298 = vmatprep.subr.bf16.mxu0 0
      %299 = vmatpush1.bf16.msra.mxu0 %v276
      %300 = vmatprep.subr.bf16.mxu0 0
      %301 = vmatpush1.bf16.msra.mxu0 %v277
      %302 = vmatprep.subr.bf16.mxu0 0
      %303 = vmatpush1.bf16.msra.mxu0 %v296
      %304 = vmatprep.subr.bf16.mxu0 0
      %305 = vmatpush1.bf16.msra.mxu0 0
      %306 = vmatprep.subr.bf16.mxu0 0
      %307 = vmatpush1.bf16.msra.mxu0 0
      %308 = vmatprep.subr.bf16.mxu0 0
      %309 = vmatpush1.bf16.msra.mxu0 0
      %310 = vmatprep.subr.bf16.mxu0 0
      %311 = vmatpush1.bf16.msra.mxu0 0
      %312 = vmatprep.subr.bf16.mxu0 0
      %313 = vmatpush1.bf16.msra.mxu0 0
      %314 = vmatprep.subr.bf16.mxu0 0
      %315 = vmatpush1.bf16.msra.mxu0 0
      %316 = vmatprep.subr.bf16.mxu0 0
      %317 = vmatpush1.bf16.msra.mxu0 0
      %318 = vmatprep.subr.bf16.mxu0 0
      %319 = vmatpush1.bf16.msra.mxu0 0
      %320 = vmatprep.subr.bf16.mxu0 0
      %321 = vmatpush1.bf16.msra.mxu0 0
      %322 = vmatprep.subr.bf16.mxu0 0
      %323 = vmatpush1.bf16.msra.mxu0 0
      %324 = vmatprep.subr.bf16.mxu0 0
      %325 = vmatpush1.bf16.msra.mxu0 0
      %326 = vmatprep.subr.bf16.mxu0 0
      %327 = vmatpush1.bf16.msra.mxu0 0
      %328 = vmatprep.subr.bf16.mxu0 0
      %329 = vmatpush1.bf16.msra.mxu0 0
      %330 = vmatprep.mubr.bf16.mxu0 0
      %331 = vmatmul.mubr.bf16.gmra.mrb[0].mxu0 %v283
      %v332 = vpop.f32.mrb[0].mxu0
      %v333 = vadd.f32 %v244, %v332
      %v334 = vpop.f32.mrb[0].mxu0
      %v335 = vpop.f32.mrb[0].mxu0
      %v336 = vadd.f32 %v244, %v335
      %v337 = vpop.f32.mrb[0].mxu0
      %338 = vmatprep.mubr.bf16.mxu0 0
      %339 = vmatmul.mubr.bf16.gmra.mrb[0].mxu0 %v286
      %v340 = vpop.f32.mrb[0].mxu0
      %v341 = vadd.f32 %v244, %v340
      %v342 = vpop.f32.mrb[0].mxu0
      %v343 = vpop.f32.mrb[0].mxu0
      %v344 = vadd.f32 %v244, %v343
      %v345 = vpop.f32.mrb[0].mxu0
      %346 = vmatprep.mubr.bf16.mxu0 0
      %347 = vmatmul.mubr.bf16.gmra.mrb[0].mxu0 %v289
      %v348 = vpop.f32.mrb[0].mxu0
      %v349 = vadd.f32 %v244, %v348
      %v350 = vpop.f32.mrb[0].mxu0
      %v351 = vpop.f32.mrb[0].mxu0
      %v352 = vadd.f32 %v244, %v351
      %v353 = vpop.f32.mrb[0].mxu0
      %354 = vmatprep.mubr.bf16.mxu0 0
      %355 = vmatmul.mubr.bf16.gmra.mrb[0].mxu0 %v292
      %v356 = vpop.f32.mrb[0].mxu0
      %v357 = vadd.f32 %v244, %v356
      %v358 = vpop.f32.mrb[0].mxu0
      %v359 = vpop.f32.mrb[0].mxu0
      %v360 = vadd.f32 %v244, %v359
      %v361 = vpop.f32.mrb[0].mxu0
      %362 = vdwg.mxu0
      %v363 = vmax.f32 %v333, 0.0
      %v364 = vmax.f32 %v336, 0.0
      %v365 = vmax.f32 %v341, 0.0
      %v366 = vmax.f32 %v344, 0.0
      %v367 = vmax.f32 %v349, 0.0
      %v368 = vmax.f32 %v352, 0.0
      %v369 = vmax.f32 %v357, 0.0
      %v370 = vmax.f32 %v360, 0.0
      %v371 = vpack.c.bf16 %v364, %v363
      %v372 = vpack.c.bf16 %v366, %v365
      %v373 = vpack.c.bf16 %v368, %v367
      %v374 = vpack.c.bf16 %v370, %v369
      %v379 = vunpack.c.l.b16 %v371
      %v380 = vunpack.c.h.b16 %v371
      %v381 = vunpack.c.l.b16 %v372
      %v382 = vunpack.c.h.b16 %v372
      %v383 = vunpack.c.l.b16 %v373
      %v384 = vunpack.c.h.b16 %v373
      %v385 = vunpack.c.l.b16 %v374
      %v386 = vunpack.c.h.b16 %v374
      %v387 = vpack.c.b16 %v379, %v379
      %v388 = vpack.c.b16 %v380, %v380
      %v389 = vpack.c.b16 %v381, %v381
      %v390 = vpack.c.b16 %v382, %v382
      %v391 = vpack.c.b16 %v383, %v383
      %v392 = vpack.c.b16 %v384, %v384
      %v393 = vpack.c.b16 %v385, %v385
      %v394 = vpack.c.b16 %v386, %v386
      %vm403 = vcmask 60416
      %404 = vst.msk [vmem:[%s223] sm:$0xf] %vm403, %v387
      %405 = vst.msk [vmem:[%s223 + $0x4] sm:$0xf] %vm403, %v388
      %406 = vst.msk [vmem:[%s223 + $0x8] sm:$0xf] %vm403, %v389
      %407 = vst.msk [vmem:[%s223 + $0xc] sm:$0xf] %vm403, %v390
      %408 = vst.msk [vmem:[%s223 + $0x10] sm:$0xf] %vm403, %v391
      %409 = vst.msk [vmem:[%s223 + $0x14] sm:$0xf] %vm403, %v392
      %410 = vst.msk [vmem:[%s223 + $0x18] sm:$0xf] %vm403, %v393
      %411 = vst.msk [vmem:[%s223 + $0x1c] sm:$0xf] %vm403, %v394
      %s412 = smul.u32 8, %s18
      %p413 = scmp.lt.s32.totalorder %s412, 63
      %s414 = scalar_select %p413, %s412, 63
      %p415 = scmp.lt.s32.totalorder %s19, 0
      %s416 = scalar_select %p415, %s19, 0
      %s417 = sadd.s32 %s416, %s414
      %s418 = smul.addr %s417, 4
      %s419 = scalar_lea.vmem %s3, %s418
      // Predicated region
      $region33: #{tpu_custom_call.1} parent=31 // pred_check
        %p420 = pneg %p124
      $region34: #{tpu_custom_call.1} parent=31 // pred_check_branch
        %422 = sbr.rel (%p420) target = $region36
      $region35: #{tpu_custom_call.1} parent=31 // pred_region
        %s423 = smul.u32 8, %s18
      $region36: #{tpu_custom_call.1} parent=31 // pred_fallthru
        _
    $region32: #{tpu_custom_call.1} parent=5 // pred_fallthru
      _
    %p424 = scmp.le.s32.totalorder 2, %s9
    // Predicated region
    $region37: #{tpu_custom_call.1} parent=5 // pred_check
      %p425 = pneg %p424
    $region38: #{tpu_custom_call.1} parent=5 // pred_check_branch
      %427 = sbr.rel (%p425) target = $region40
    $region39: #{tpu_custom_call.1} parent=5 // pred_region
      %s428 = ssub.s32 %s9, 2
      // Predicated region
      $region41: #{tpu_custom_call.1} parent=39 // pred_check
        %p429 = pneg %p130
      $region42: #{tpu_custom_call.1} parent=39 // pred_check_branch
        %431 = sbr.rel (%p429) target = $region44
      $region43: #{tpu_custom_call.1} parent=39 // pred_region
        %s432 = smul.u32 8, %s20
        %p433 = scmp.lt.s32.totalorder %s432, 63
        %s434 = scalar_select %p433, %s432, 63
        %p435 = scmp.lt.s32.totalorder %s21, 0
        %s436 = scalar_select %p435, %s21, 0
        %s437 = sadd.s32 %s436, %s434
        %s438 = smul.addr %s437, 4
        %s439 = scalar_lea.vmem %s3, %s438
      $region44: #{tpu_custom_call.1} parent=39 // pred_fallthru
        _
    $region40: #{tpu_custom_call.1} parent=5 // pred_fallthru
      _
  $region6: #{tpu_custom_call.1} parent=0 // loop_footer
    %s13 = sadd.s32 1, %s9
  $region7: #{tpu_custom_call.1} parent=0 // loop_footer_branch
    %8 = sbr.rel target = $region3
  $region8: #{tpu_custom_call.1} parent=0 // loop_exit
    _

</llo_original>
